<compile_context>
chip_gen: v7x
topology: tpu7x:2x2x1
jax: 0.10.0
libtpu: 0.0.40
codegen_flags: <defaults>
</compile_context>

<pallas_src>
import jax
import jax.numpy as jnp
from jax.experimental import pallas as pl
from jax.experimental.pallas import tpu as pltpu

# Quantized dtype ranges (mirrors torch.quint8 / torch.qint8 / torch.qint32)
QDTYPE_RANGES = {
    "quint8": (0, 255),
    "qint8": (-128, 127),
    "qint32": (-2**31, 2**31 - 1),
}


def _round_up(a, b):
    return ((a + b - 1) // b) * b


def _qdq_kernel(params_ref, x_ref, o_ref):
    # params (SMEM, scalar-prefetched): [inv_scale, scale, lo, hi]
    # zero_point is folded into lo/hi:
    #   clamp(round(x/s) + zp, qmin, qmax) - zp == clamp(round(x*inv_s), qmin-zp, qmax-zp)
    inv_scale = params_ref[0]
    scale = params_ref[1]
    lo = params_ref[2]
    hi = params_ref[3]
    x = x_ref[...].astype(jnp.float32)               # in-kernel cast (free on VPU)
    q = jnp.clip(jnp.round(x * inv_scale), lo, hi)   # round-half-to-even, like torch
    o_ref[...] = (q * scale).astype(o_ref.dtype)


def _max_block_bytes():
    # 2 MiB blocks (in+out double-buffered = 8 MiB) fit v5e's 16 MiB default
    # scoped-VMEM limit.  v6e / v7x default to 32 MiB, so 4 MiB blocks there
    # amortize the ~0.35 us per-grid-step overhead better.
    try:
        kind = jax.devices()[0].device_kind.lower()
    except Exception:
        return 2 * 1024 * 1024
    if "v6" in kind or "v7" in kind or "7x" in kind:
        return 4 * 1024 * 1024
    return 2 * 1024 * 1024


def quantize_dequantize(x, scale, zero_point, dtype="quint8"):
    """Elementwise fake-quant (quantize_per_tensor -> dequantize) as a Pallas kernel."""
    qmin, qmax = QDTYPE_RANGES[dtype]
    # TODO(synk): qint32 bounds are not exactly representable in f32; the
    # quint8/qint8 paths (used by the test) are exact.

    orig_shape = x.shape
    # Keep floating inputs in their native dtype (cast inside the kernel to
    # avoid an extra full-HBM cast pass); promote anything else up front.
    if x.dtype not in (jnp.float32, jnp.bfloat16, jnp.float16):
        x = x.astype(jnp.float32)
    x_flat = x.reshape(-1)
    n = x_flat.shape[0]
    sub = 8 if x.dtype == jnp.float32 else 16        # sublane packing granularity

    # Pick the widest lane count that divides n so the common path needs no
    # full-tensor pad / slice passes around the kernel.
    lanes = None
    for cand in (512, 256, 128):
        if n % cand == 0:
            lanes = cand
            break
    tail = 0
    if lanes is None:
        lanes = 128
        tail = (-n) % lanes
        x_flat = jnp.pad(x_flat, (0, tail))
    rows = x_flat.shape[0] // lanes
    x2d = x_flat.reshape(rows, lanes)

    if rows <= sub:
        # Tiny input: single full-extent block (the (8,128) rule does not
        # apply to full-array blocks).
        tile_rows = rows
    else:
        max_tile_rows = max(sub, _round_up(_max_block_bytes() // (lanes * 4), sub))
        min_tile_rows = max(sub, _round_up((512 * 1024) // (lanes * 4), sub))
        # Target >= 6 grid steps (>= 3 per TensorCore on v7x megacore) so the
        # DMA double-buffering stays primed on both cores.
        target = _round_up(pl.cdiv(rows, 6), sub)
        tile_rows = min(max_tile_rows, max(min_tile_rows, target))
        tile_rows = min(tile_rows, _round_up(rows, sub))
        # Avoid odd multi-step grids (2/1 imbalance across the two v7x TCs).
        g = pl.cdiv(rows, tile_rows)
        if g > 1 and g % 2 == 1:
            tile_rows = max(sub, _round_up(pl.cdiv(rows, g + 1), sub))
    # Partial last block is fine: edge reads are clipped/garbage we never use,
    # edge writes are masked — no row-dim pad needed.
    grid = (pl.cdiv(rows, tile_rows),)

    # Runtime scalars via scalar prefetch: new scale/zero_point never retraces.
    scale_f = jnp.asarray(scale, jnp.float32)
    zp_f = jnp.asarray(zero_point, jnp.float32)
    params = jnp.stack([1.0 / scale_f, scale_f,
                        jnp.float32(qmin) - zp_f,
                        jnp.float32(qmax) - zp_f])

    in_bytes = rows * lanes * x2d.dtype.itemsize
    out_bytes = rows * lanes * 4

    out2d = pl.pallas_call(
        _qdq_kernel,
        out_shape=jax.ShapeDtypeStruct((rows, lanes), jnp.float32),
        grid_spec=pltpu.PrefetchScalarGridSpec(
            num_scalar_prefetch=1,
            grid=grid,
            in_specs=[pl.BlockSpec((tile_rows, lanes), lambda i, params: (i, 0))],
            out_specs=pl.BlockSpec((tile_rows, lanes), lambda i, params: (i, 0)),
        ),
        compiler_params=pltpu.CompilerParams(
            dimension_semantics=("parallel",)),
        cost_estimate=pl.CostEstimate(
            flops=4 * rows * lanes,
            transcendentals=0,
            bytes_accessed=in_bytes + out_bytes),
    )(params, x2d)

    out_flat = out2d.reshape(-1)
    if tail:
        out_flat = out_flat[:n]
    return out_flat.reshape(orig_shape)


def _reference(x, scale, zero_point, dtype):
    qmin, qmax = QDTYPE_RANGES[dtype]
    x = x.astype(jnp.float32)
    q = jnp.clip(jnp.round(x / scale) + zero_point, qmin, qmax)
    return ((q - zero_point) * scale).astype(jnp.float32)


if __name__ == "__main__":
    key = jax.random.PRNGKey(0)
    # small NCHW input consistent with the test module
    x = jax.random.normal(key, (2, 4, 16, 16), dtype=jnp.float32) * 3.0

    scale = 0.1
    zero_point = 8
    dtype = "quint8"

    y = quantize_dequantize(x, scale, zero_point, dtype)
    y = jax.block_until_ready(y)

    y_ref = _reference(x, scale, zero_point, dtype)
    assert y.shape == x.shape and y.dtype == jnp.float32
    assert jnp.allclose(y, y_ref, atol=1e-6), "mismatch vs reference"

    print("KERNEL_OK")
</pallas_src>

<mosaic_0001>
module attributes {stable_mosaic.version = 11 : i64} {
  func.func @_qdq_kernel(%arg0: i32, %arg1: memref<4xf32, #tpu.memory_space<smem>>, %arg2: memref<4x512xf32, #tpu.memory_space<vmem>>, %arg3: memref<4x512xf32, #tpu.memory_space<vmem>>) attributes {dimension_semantics = [#tpu.dimension_semantics<parallel>], iteration_bounds = array<i64: 1>, scalar_prefetch = 1 : i64, scratch_operands = 0 : i64, tpu.core_type = #tpu.core_type<tc>, window_params = [{transform_indices = @transform_0, window_bounds = array<i64: 4, 512>}, {transform_indices = @transform_1, window_bounds = array<i64: 4, 512>}]} {
    %c0 = arith.constant 0 : index
    %0 = memref.load %arg1[%c0] : memref<4xf32, #tpu.memory_space<smem>>
    %c1 = arith.constant 1 : index
    %1 = memref.load %arg1[%c1] : memref<4xf32, #tpu.memory_space<smem>>
    %c2 = arith.constant 2 : index
    %2 = memref.load %arg1[%c2] : memref<4xf32, #tpu.memory_space<smem>>
    %c3 = arith.constant 3 : index
    %3 = memref.load %arg1[%c3] : memref<4xf32, #tpu.memory_space<smem>>
    %c0_0 = arith.constant 0 : index
    %c0_1 = arith.constant 0 : index
    %4 = vector.load %arg2[%c0_0, %c0_1] : memref<4x512xf32, #tpu.memory_space<vmem>>, vector<4x512xf32>
    %5 = vector.broadcast %0 : f32 to vector<4x512xf32>
    %6 = arith.mulf %4, %5 : vector<4x512xf32>
    %7 = math.roundeven %6 : vector<4x512xf32>
    %8 = vector.broadcast %2 : f32 to vector<4x512xf32>
    %9 = arith.maximumf %8, %7 : vector<4x512xf32>
    %10 = vector.broadcast %3 : f32 to vector<4x512xf32>
    %11 = arith.minimumf %10, %9 : vector<4x512xf32>
    %12 = vector.broadcast %1 : f32 to vector<4x512xf32>
    %13 = arith.mulf %11, %12 : vector<4x512xf32>
    %c0_2 = arith.constant 0 : index
    %c0_3 = arith.constant 0 : index
    %14 = vector.load %arg3[%c0_2, %c0_3] : memref<4x512xf32, #tpu.memory_space<vmem>>, vector<4x512xf32>
    tpu.vector_store %arg3[%c0_2, %c0_3], %13 {strides = array<i32>} : memref<4x512xf32, #tpu.memory_space<vmem>>, vector<4x512xf32>,
    return
  }
  func.func @transform_0(%arg0: i32, %arg1: memref<4xf32, #tpu.memory_space<smem>>) -> (i32, i32) {
    %c0_i32 = arith.constant 0 : i32
    %c0_i32_0 = arith.constant 0 : i32
    return %arg0, %c0_i32 : i32, i32
  }
  func.func @transform_1(%arg0: i32, %arg1: memref<4xf32, #tpu.memory_space<smem>>) -> (i32, i32) {
    %c0_i32 = arith.constant 0 : i32
    %c0_i32_0 = arith.constant 0 : i32
    return %arg0, %c0_i32 : i32, i32
  }
}

</mosaic_0001>

<llo_original>
// kernel: tpu_custom_call.1
$region0: #{tpu_custom_call.1}
  #allocation0 [shape = 'u32[]', space=smem, size = 0x4, offset = 0x4, fixed_abs, tag = 'smem constant byte address 0x4 - core index']
  #allocation1 [shape = 'u32[144,128]{1,0:T(1,128)}', space=vmem, size = 0x12000, scoped, tag = 'internal scratch']
  #allocation2 [shape = 's32[1]{0}', space=sflag, size = 0x4, scoped, tag = 'scoped memory for tpu_custom_call.1']
  #allocation3 [shape = 'u8[512]{0}', space=smem, size = 0x200, scoped, tag = 'prefetched SMEM operand 0']
  %s0 = inlined_call_operand.hbm [shape: f32[4], index: 0, kind: input, shape index: {}]
  %s1 = inlined_call_operand.hbm [shape: f32[4,512], index: 1, kind: input, shape index: {}]
  %s2 = inlined_call_operand.hbm [shape: f32[4,512], index: 2, kind: output, shape index: {}]
  %s3 = sld [smem:[#allocation0]]
  $region18: #{tpu_custom_call.1} parent=0
    _
  %s5 = ssub.s32 1, %s3
  %s6 = scalar_select 0, %s5, %s3
  %8 = dma.hbm_to_smem %s0, 16, [#allocation3], [#allocation2]
  %9 = dma.done [#allocation2], 16
  %10 = sfence
  $region1: #{tpu_custom_call.1} parent=0
    #allocation4 [shape = 'u8[8192]{0}', space=vmem, size = 0x2000, scoped, tag = 'input window, operand 1, single buffered']
    #allocation5 [shape = 's32[1]{0}', space=sflag, size = 0x4, scoped, tag = 'scoped memory for tpu_custom_call.1']
    #allocation6 [shape = 's32[1]{0}', space=sflag, size = 0x4, scoped, tag = 'scoped memory for tpu_custom_call.1']
    #allocation7 [shape = 'u8[8192]{0}', space=vmem, size = 0x2000, scoped, tag = 'output window, operand 0, single buffered']
    %11 = vsyncpa [#allocation5], 0
    %12 = vsyncpa [#allocation6], 0
    // Predicated region
    $region2: #{tpu_custom_call.1} parent=1 // pred_check
      _
    $region3: #{tpu_custom_call.1} parent=1 // pred_check_branch
      %14 = sbr.rel (0) target = $region5
    $region4: #{tpu_custom_call.1} parent=1 // pred_region
      %s16 = ssub.s32 256, 256
      %17 = vsyncadd [#allocation5], %s16
      %s19 = sshll.u32 [#allocation4], 4
      %s20 = int_to_ptr.vmem [resolvable:$true] %s19
      %22 = dma.hbm_to_vmem [thread:$0]  %s1, 256, %s20, [#allocation5]
    $region5: #{tpu_custom_call.1} parent=1 // pred_fallthru
      _
    // Predicated region
    $region6: #{tpu_custom_call.1} parent=1 // pred_check
      _
    $region7: #{tpu_custom_call.1} parent=1 // pred_check_branch
      %24 = sbr.rel (0) target = $region9
    $region8: #{tpu_custom_call.1} parent=1 // pred_region
      %25 = dma.done [#allocation5], 256
    $region9: #{tpu_custom_call.1} parent=1 // pred_fallthru
      _
    %s26 = sld [smem:[#allocation3]]
    %s27 = sld [smem:[#allocation3 + $0x1]]
    %s28 = sld [smem:[#allocation3 + $0x2]]
    %s29 = sld [smem:[#allocation3 + $0x3]]
    %v30 = vld [vmem:[#allocation4] sm:$0xff]
    %v31 = vld [vmem:[#allocation4 + $0x8] sm:$0xff]
    %v32 = vstv %s26
    %v33 = vmul.f32 %v30, %v32
    %v34 = vmul.f32 %v31, %v32
    %v35 = vround.ne.pseudo %v33
    %v36 = vround.ne.pseudo %v34
    %v37 = vstv %s28
    %v38 = vmax.f32 %v37, %v35
    %v39 = vmax.f32 %v37, %v36
    %v40 = vstv %s29
    %v41 = vmin.f32 %v40, %v38
    %v42 = vmin.f32 %v40, %v39
    %v43 = vstv %s27
    %v44 = vmul.f32 %v41, %v43
    %v45 = vmul.f32 %v42, %v43
    %46 = vst [vmem:[#allocation7] sm:$0xff] %v44
    %47 = vst [vmem:[#allocation7 + $0x8] sm:$0xff] %v45
    // Predicated region
    $region10: #{tpu_custom_call.1} parent=1 // pred_check
      _
    $region11: #{tpu_custom_call.1} parent=1 // pred_check_branch
      %49 = sbr.rel (0) target = $region13
    $region12: #{tpu_custom_call.1} parent=1 // pred_region
      %s51 = ssub.s32 256, 256
      %52 = vsyncadd [#allocation6], %s51
      %s54 = sshll.u32 [#allocation7], 4
      %s55 = int_to_ptr.vmem [resolvable:$true] %s54
      %57 = dma.vmem_to_hbm [thread:$0]  %s55, 256, %s2, [#allocation6]
    $region13: #{tpu_custom_call.1} parent=1 // pred_fallthru
      _
    // Predicated region
    $region14: #{tpu_custom_call.1} parent=1 // pred_check
      _
    $region15: #{tpu_custom_call.1} parent=1 // pred_check_branch
      %59 = sbr.rel (0) target = $region17
    $region16: #{tpu_custom_call.1} parent=1 // pred_region
      %60 = dma.done [#allocation6], 256
    $region17: #{tpu_custom_call.1} parent=1 // pred_fallthru
      _
    %61 = vsyncpa [#allocation5], 1
    %62 = vsyncpa [#allocation6], 1

</llo_original>
